<compile_context>
chip_gen: v7x
topology: tpu7x:2x2x1
jax: 0.10.0
libtpu: 0.0.40
codegen_flags: <defaults>
</compile_context>

<pallas_src>
import functools

import jax
import jax.numpy as jnp
import numpy as np
from jax.experimental import pallas as pl
from jax.experimental.pallas import tpu as pltpu


def resblock_kernel(x_ref, tw1t_ref, tb1_ref, tw2t_ref, tb2_ref,
                    cw1_ref, cb1_ref, cw2_ref, cb2_ref, o_ref, *, block_batch):
    tb = block_batch
    _, C, L = x_ref.shape              # block is [TB, C=enc_in, L=d_model]

    mm_dtype = tw1t_ref.dtype          # matmul-operand dtype chosen by the wrapper

    def dot(a, b):                     # MXU matmul with f32 accumulation
        return jnp.dot(a.astype(mm_dtype), b.astype(mm_dtype),
                       preferred_element_type=jnp.float32)

    tw1t = tw1t_ref[...]               # [L, L]
    tw2t = tw2t_ref[...]               # [L, L]
    tb1 = tb1_ref[...]                 # [1, L]  f32
    tb2 = tb2_ref[...]                 # [1, L]  f32
    cw1 = cw1_ref[...]                 # [L, C]
    cw2 = cw2_ref[...]                 # [C, L]
    cb1 = cb1_ref[...]                 # [L, 1]  f32
    cb2 = cb2_ref[...]                 # [C, 1]  f32

    def temporal(v):                   # [R, L] -> [R, L]; mixes along d_model (lane axis)
        z = jnp.maximum(dot(v, tw1t) + tb1, 0.0)
        return dot(z, tw2t) + tb2

    x3 = x_ref[...]
    if x3.dtype != jnp.float32:        # keep bias/ReLU/residual math in f32
        x3 = x3.astype(jnp.float32)

    # ---- temporal mix + residual 1 ----
    if C % 8 == 0:
        # Fold (batch, channel) into one sublane-aligned row axis: one wide
        # matmul pair with M = TB*C instead of TB tiny ones.
        x2 = x3.reshape(tb * C, L)
        y2 = x2 + temporal(x2)
        y_parts = [y2[b * C:(b + 1) * C, :] for b in range(tb)]
    else:
        y_parts = [x3[b] + temporal(x3[b]) for b in range(tb)]

    # ---- channel mix + residual 2 (contracts the enc_in sublane axis) ----
    for b in range(tb):
        yb = y_parts[b]                               # [C, L]
        h = jnp.maximum(dot(cw1, yb) + cb1, 0.0)      # [L, L]  lane-dense
        g = dot(cw2, h) + cb2                         # [C, L]  lane-dense
        o_ref[b] = (yb + g).astype(o_ref.dtype)
    # TODO(synk): dropout omitted (inference/eval semantics -> identity)


def _pick_block_batch(B, C, L, itemsize, vmem_block_budget=8 << 20):
    """Largest divisor of B whose (double-buffered in+out) blocks fit a modest
    VMEM budget; prefer >= 2 grid steps so both v7x TensorCores get work."""
    divisors = [d for d in range(1, B + 1) if B % d == 0]
    fits = [d for d in divisors if 4 * d * C * L * itemsize <= vmem_block_budget] or [1]
    two_step = [d for d in fits if B // d >= 2]
    return max(two_step) if two_step else max(fits)


def resblock_forward(x, params, *, block_batch=None, matmul_dtype=None):
    """x: [B, d_model, enc_in]; params in PyTorch nn.Linear convention (W = [out, in])."""
    B, L, C = x.shape
    f32 = jnp.float32
    wdt = jnp.dtype(matmul_dtype) if matmul_dtype is not None else x.dtype

    # Pre-arrange weights so the kernel never transposes.
    tw1t = params["tw1"].T.astype(wdt)            # [L, L]
    tw2t = params["tw2"].T.astype(wdt)            # [L, L]
    tb1 = params["tb1"].reshape(1, L).astype(f32)
    tb2 = params["tb2"].reshape(1, L).astype(f32)
    cw1 = params["cw1"].astype(wdt)               # [L, C]
    cw2 = params["cw2"].astype(wdt)               # [C, L]
    cb1 = params["cb1"].reshape(L, 1).astype(f32)
    cb2 = params["cb2"].reshape(C, 1).astype(f32)

    # Layout plumbing outside the kernel: put d_model on the lane axis.
    xt = jnp.transpose(x, (0, 2, 1))              # [B, C, L]

    tb = block_batch if block_batch is not None else _pick_block_batch(
        B, C, L, x.dtype.itemsize)
    assert B % tb == 0

    const2d = lambda shape: pl.BlockSpec(shape, lambda i: (0, 0))

    out_t = pl.pallas_call(
        functools.partial(resblock_kernel, block_batch=tb),
        out_shape=jax.ShapeDtypeStruct((B, C, L), x.dtype),
        grid=(B // tb,),
        in_specs=[
            pl.BlockSpec((tb, C, L), lambda i: (i, 0, 0)),   # TB batch slabs per step
            const2d((L, L)),   # tw1^T  (constant block index -> stays VMEM-resident)
            const2d((1, L)),   # tb1
            const2d((L, L)),   # tw2^T
            const2d((1, L)),   # tb2
            const2d((L, C)),   # cw1
            const2d((L, 1)),   # cb1
            const2d((C, L)),   # cw2
            const2d((C, 1)),   # cb2
        ],
        out_specs=pl.BlockSpec((tb, C, L), lambda i: (i, 0, 0)),
        compiler_params=pltpu.CompilerParams(
            dimension_semantics=("parallel",),
            vmem_limit_bytes=32 * 1024 * 1024,
        ),
    )(xt, tw1t, tb1, tw2t, tb2, cw1, cb1, cw2, cb2)

    return jnp.transpose(out_t, (0, 2, 1))        # back to [B, d_model, enc_in]


def resblock_reference(x, p):
    """Pure-JAX reference mirroring the PyTorch forward (eval mode)."""
    def linear(v, w, b):
        return v @ w.T + b
    t = jnp.swapaxes(x, 1, 2)
    t = jnp.maximum(linear(t, p["tw1"], p["tb1"]), 0.0)
    t = linear(t, p["tw2"], p["tb2"])
    x = x + jnp.swapaxes(t, 1, 2)
    c = jnp.maximum(linear(x, p["cw1"], p["cb1"]), 0.0)
    c = linear(c, p["cw2"], p["cb2"])
    return x + c


if __name__ == "__main__":
    B, d_model, enc_in = 4, 128, 8    # L = d_model (lane-aligned), C = enc_in

    key = jax.random.PRNGKey(0)
    ks = jax.random.split(key, 9)

    # Deterministic synthetic parameters (PyTorch nn.Linear convention: W is [out, in]).
    params = {
        "tw1": jax.random.normal(ks[0], (d_model, d_model), jnp.float32) * 0.1,
        "tb1": jax.random.normal(ks[1], (d_model,), jnp.float32) * 0.1,
        "tw2": jax.random.normal(ks[2], (d_model, d_model), jnp.float32) * 0.1,
        "tb2": jax.random.normal(ks[3], (d_model,), jnp.float32) * 0.1,
        "cw1": jax.random.normal(ks[4], (d_model, enc_in), jnp.float32) * 0.1,
        "cb1": jax.random.normal(ks[5], (d_model,), jnp.float32) * 0.1,
        "cw2": jax.random.normal(ks[6], (enc_in, d_model), jnp.float32) * 0.1,
        "cb2": jax.random.normal(ks[7], (enc_in,), jnp.float32) * 0.1,
    }
    x = jax.random.normal(ks[8], (B, d_model, enc_in), jnp.float32)

    out = jax.block_until_ready(resblock_forward(x, params))
    ref = jax.block_until_ready(resblock_reference(x, params))

    assert out.shape == (B, d_model, enc_in)
    np.testing.assert_allclose(np.asarray(out), np.asarray(ref), rtol=1e-4, atol=1e-4)

    print("KERNEL_OK")
</pallas_src>

<mosaic_0001>
module attributes {stable_mosaic.version = 11 : i64} {
  func.func @resblock_kernel(%arg0: i32, %arg1: memref<2x8x128xf32, #tpu.memory_space<vmem>>, %arg2: memref<128x128xf32, #tpu.memory_space<vmem>>, %arg3: memref<1x128xf32, #tpu.memory_space<vmem>>, %arg4: memref<128x128xf32, #tpu.memory_space<vmem>>, %arg5: memref<1x128xf32, #tpu.memory_space<vmem>>, %arg6: memref<128x8xf32, #tpu.memory_space<vmem>>, %arg7: memref<128x1xf32, #tpu.memory_space<vmem>>, %arg8: memref<8x128xf32, #tpu.memory_space<vmem>>, %arg9: memref<8x1xf32, #tpu.memory_space<vmem>>, %arg10: memref<2x8x128xf32, #tpu.memory_space<vmem>>) attributes {dimension_semantics = [#tpu.dimension_semantics<parallel>], iteration_bounds = array<i64: 2>, scalar_prefetch = 0 : i64, scratch_operands = 0 : i64, tpu.core_type = #tpu.core_type<tc>, window_params = [{transform_indices = @transform_0, window_bounds = array<i64: 2, 8, 128>}, {pipeline_mode = #tpu.pipeline_mode<synchronous>, transform_indices = @transform_1, window_bounds = array<i64: 128, 128>}, {pipeline_mode = #tpu.pipeline_mode<synchronous>, transform_indices = @transform_2, window_bounds = array<i64: 1, 128>}, {pipeline_mode = #tpu.pipeline_mode<synchronous>, transform_indices = @transform_3, window_bounds = array<i64: 128, 128>}, {pipeline_mode = #tpu.pipeline_mode<synchronous>, transform_indices = @transform_4, window_bounds = array<i64: 1, 128>}, {pipeline_mode = #tpu.pipeline_mode<synchronous>, transform_indices = @transform_5, window_bounds = array<i64: 128, 8>}, {pipeline_mode = #tpu.pipeline_mode<synchronous>, transform_indices = @transform_6, window_bounds = array<i64: 128, 1>}, {pipeline_mode = #tpu.pipeline_mode<synchronous>, transform_indices = @transform_7, window_bounds = array<i64: 8, 128>}, {pipeline_mode = #tpu.pipeline_mode<synchronous>, transform_indices = @transform_8, window_bounds = array<i64: 8, 1>}, {transform_indices = @transform_9, window_bounds = array<i64: 2, 8, 128>}]} {
    %c0 = arith.constant 0 : index
    %c0_0 = arith.constant 0 : index
    %0 = vector.load %arg2[%c0, %c0_0] : memref<128x128xf32, #tpu.memory_space<vmem>>, vector<128x128xf32>
    %c0_1 = arith.constant 0 : index
    %c0_2 = arith.constant 0 : index
    %1 = vector.load %arg4[%c0_1, %c0_2] : memref<128x128xf32, #tpu.memory_space<vmem>>, vector<128x128xf32>
    %c0_3 = arith.constant 0 : index
    %c0_4 = arith.constant 0 : index
    %2 = vector.load %arg3[%c0_3, %c0_4] : memref<1x128xf32, #tpu.memory_space<vmem>>, vector<1x128xf32>
    %c0_5 = arith.constant 0 : index
    %c0_6 = arith.constant 0 : index
    %3 = vector.load %arg5[%c0_5, %c0_6] : memref<1x128xf32, #tpu.memory_space<vmem>>, vector<1x128xf32>
    %c0_7 = arith.constant 0 : index
    %c0_8 = arith.constant 0 : index
    %4 = vector.load %arg6[%c0_7, %c0_8] : memref<128x8xf32, #tpu.memory_space<vmem>>, vector<128x8xf32>
    %c0_9 = arith.constant 0 : index
    %c0_10 = arith.constant 0 : index
    %5 = vector.load %arg8[%c0_9, %c0_10] : memref<8x128xf32, #tpu.memory_space<vmem>>, vector<8x128xf32>
    %c0_11 = arith.constant 0 : index
    %c0_12 = arith.constant 0 : index
    %6 = vector.load %arg7[%c0_11, %c0_12] : memref<128x1xf32, #tpu.memory_space<vmem>>, vector<128x1xf32>
    %c0_13 = arith.constant 0 : index
    %c0_14 = arith.constant 0 : index
    %7 = vector.load %arg9[%c0_13, %c0_14] : memref<8x1xf32, #tpu.memory_space<vmem>>, vector<8x1xf32>
    %c0_15 = arith.constant 0 : index
    %c0_16 = arith.constant 0 : index
    %c0_17 = arith.constant 0 : index
    %8 = vector.load %arg1[%c0_15, %c0_16, %c0_17] : memref<2x8x128xf32, #tpu.memory_space<vmem>>, vector<2x8x128xf32>
    %9 = vector.shape_cast %8 : vector<2x8x128xf32> to vector<16x128xf32>
    %cst = arith.constant dense<0.000000e+00> : vector<16x128xf32>
    %10 = tpu.matmul %9, %0, %cst {dimension_numbers = #tpu.dot_dimension_numbers<[1], [0], [0], [1], [0, 0, 1, 1], [], []>} : vector<16x128xf32>, vector<128x128xf32>, vector<16x128xf32> -> vector<16x128xf32>
    %11 = vector.broadcast %2 : vector<1x128xf32> to vector<16x128xf32>
    %12 = arith.addf %10, %11 : vector<16x128xf32>
    %cst_18 = arith.constant 0.000000e+00 : f32
    %13 = vector.broadcast %cst_18 : f32 to vector<16x128xf32>
    %14 = arith.maximumf %12, %13 : vector<16x128xf32>
    %cst_19 = arith.constant dense<0.000000e+00> : vector<16x128xf32>
    %15 = tpu.matmul %14, %1, %cst_19 {dimension_numbers = #tpu.dot_dimension_numbers<[1], [0], [0], [1], [0, 0, 1, 1], [], []>} : vector<16x128xf32>, vector<128x128xf32>, vector<16x128xf32> -> vector<16x128xf32>
    %16 = vector.broadcast %3 : vector<1x128xf32> to vector<16x128xf32>
    %17 = arith.addf %15, %16 : vector<16x128xf32>
    %18 = arith.addf %9, %17 : vector<16x128xf32>
    %19 = vector.extract_strided_slice %18 {offsets = [0, 0], sizes = [8, 128], strides = [1, 1]} : vector<16x128xf32> to vector<8x128xf32>
    %20 = vector.extract_strided_slice %18 {offsets = [8, 0], sizes = [8, 128], strides = [1, 1]} : vector<16x128xf32> to vector<8x128xf32>
    %cst_20 = arith.constant dense<0.000000e+00> : vector<128x128xf32>
    %21 = tpu.matmul %4, %19, %cst_20 {dimension_numbers = #tpu.dot_dimension_numbers<[1], [0], [0], [1], [0, 0, 1, 1], [], []>} : vector<128x8xf32>, vector<8x128xf32>, vector<128x128xf32> -> vector<128x128xf32>
    %22 = vector.broadcast %6 : vector<128x1xf32> to vector<128x128xf32>
    %23 = arith.addf %21, %22 : vector<128x128xf32>
    %cst_21 = arith.constant 0.000000e+00 : f32
    %24 = vector.broadcast %cst_21 : f32 to vector<128x128xf32>
    %25 = arith.maximumf %23, %24 : vector<128x128xf32>
    %cst_22 = arith.constant dense<0.000000e+00> : vector<8x128xf32>
    %26 = tpu.matmul %5, %25, %cst_22 {dimension_numbers = #tpu.dot_dimension_numbers<[1], [0], [0], [1], [0, 0, 1, 1], [], []>} : vector<8x128xf32>, vector<128x128xf32>, vector<8x128xf32> -> vector<8x128xf32>
    %27 = vector.broadcast %7 : vector<8x1xf32> to vector<8x128xf32>
    %28 = arith.addf %26, %27 : vector<8x128xf32>
    %29 = arith.addf %19, %28 : vector<8x128xf32>
    %c0_23 = arith.constant 0 : index
    %c0_24 = arith.constant 0 : index
    %c0_25 = arith.constant 0 : index
    %30 = vector.load %arg10[%c0_23, %c0_24, %c0_25] : memref<2x8x128xf32, #tpu.memory_space<vmem>>, vector<1x8x128xf32>
    %31 = vector.shape_cast %30 : vector<1x8x128xf32> to vector<8x128xf32>
    %32 = vector.shape_cast %29 : vector<8x128xf32> to vector<1x8x128xf32>
    tpu.vector_store %arg10[%c0_23, %c0_24, %c0_25], %32 {strides = array<i32>} : memref<2x8x128xf32, #tpu.memory_space<vmem>>, vector<1x8x128xf32>,
    %cst_26 = arith.constant dense<0.000000e+00> : vector<128x128xf32>
    %33 = tpu.matmul %4, %20, %cst_26 {dimension_numbers = #tpu.dot_dimension_numbers<[1], [0], [0], [1], [0, 0, 1, 1], [], []>} : vector<128x8xf32>, vector<8x128xf32>, vector<128x128xf32> -> vector<128x128xf32>
    %34 = vector.broadcast %6 : vector<128x1xf32> to vector<128x128xf32>
    %35 = arith.addf %33, %34 : vector<128x128xf32>
    %cst_27 = arith.constant 0.000000e+00 : f32
    %36 = vector.broadcast %cst_27 : f32 to vector<128x128xf32>
    %37 = arith.maximumf %35, %36 : vector<128x128xf32>
    %cst_28 = arith.constant dense<0.000000e+00> : vector<8x128xf32>
    %38 = tpu.matmul %5, %37, %cst_28 {dimension_numbers = #tpu.dot_dimension_numbers<[1], [0], [0], [1], [0, 0, 1, 1], [], []>} : vector<8x128xf32>, vector<128x128xf32>, vector<8x128xf32> -> vector<8x128xf32>
    %39 = vector.broadcast %7 : vector<8x1xf32> to vector<8x128xf32>
    %40 = arith.addf %38, %39 : vector<8x128xf32>
    %41 = arith.addf %20, %40 : vector<8x128xf32>
    %c1 = arith.constant 1 : index
    %c0_29 = arith.constant 0 : index
    %c0_30 = arith.constant 0 : index
    %42 = vector.load %arg10[%c1, %c0_29, %c0_30] : memref<2x8x128xf32, #tpu.memory_space<vmem>>, vector<1x8x128xf32>
    %43 = vector.shape_cast %42 : vector<1x8x128xf32> to vector<8x128xf32>
    %44 = vector.shape_cast %41 : vector<8x128xf32> to vector<1x8x128xf32>
    tpu.vector_store %arg10[%c1, %c0_29, %c0_30], %44 {strides = array<i32>} : memref<2x8x128xf32, #tpu.memory_space<vmem>>, vector<1x8x128xf32>,
    return
  }
  func.func @transform_0(%arg0: i32) -> (i32, i32, i32) {
    %c0_i32 = arith.constant 0 : i32
    %c0_i32_0 = arith.constant 0 : i32
    %c0_i32_1 = arith.constant 0 : i32
    return %arg0, %c0_i32, %c0_i32_0 : i32, i32, i32
  }
  func.func @transform_1(%arg0: i32) -> (i32, i32) {
    %c0_i32 = arith.constant 0 : i32
    %c0_i32_0 = arith.constant 0 : i32
    %c0_i32_1 = arith.constant 0 : i32
    return %c0_i32, %c0_i32_0 : i32, i32
  }
  func.func @transform_2(%arg0: i32) -> (i32, i32) {
    %c0_i32 = arith.constant 0 : i32
    %c0_i32_0 = arith.constant 0 : i32
    %c0_i32_1 = arith.constant 0 : i32
    return %c0_i32, %c0_i32_0 : i32, i32
  }
  func.func @transform_3(%arg0: i32) -> (i32, i32) {
    %c0_i32 = arith.constant 0 : i32
    %c0_i32_0 = arith.constant 0 : i32
    %c0_i32_1 = arith.constant 0 : i32
    return %c0_i32, %c0_i32_0 : i32, i32
  }
  func.func @transform_4(%arg0: i32) -> (i32, i32) {
    %c0_i32 = arith.constant 0 : i32
    %c0_i32_0 = arith.constant 0 : i32
    %c0_i32_1 = arith.constant 0 : i32
    return %c0_i32, %c0_i32_0 : i32, i32
  }
  func.func @transform_5(%arg0: i32) -> (i32, i32) {
    %c0_i32 = arith.constant 0 : i32
    %c0_i32_0 = arith.constant 0 : i32
    %c0_i32_1 = arith.constant 0 : i32
    return %c0_i32, %c0_i32_0 : i32, i32
  }
  func.func @transform_6(%arg0: i32) -> (i32, i32) {
    %c0_i32 = arith.constant 0 : i32
    %c0_i32_0 = arith.constant 0 : i32
    %c0_i32_1 = arith.constant 0 : i32
    return %c0_i32, %c0_i32_0 : i32, i32
  }
  func.func @transform_7(%arg0: i32) -> (i32, i32) {
    %c0_i32 = arith.constant 0 : i32
    %c0_i32_0 = arith.constant 0 : i32
    %c0_i32_1 = arith.constant 0 : i32
    return %c0_i32, %c0_i32_0 : i32, i32
  }
  func.func @transform_8(%arg0: i32) -> (i32, i32) {
    %c0_i32 = arith.constant 0 : i32
    %c0_i32_0 = arith.constant 0 : i32
    %c0_i32_1 = arith.constant 0 : i32
    return %c0_i32, %c0_i32_0 : i32, i32
  }
  func.func @transform_9(%arg0: i32) -> (i32, i32, i32) {
    %c0_i32 = arith.constant 0 : i32
    %c0_i32_0 = arith.constant 0 : i32
    %c0_i32_1 = arith.constant 0 : i32
    return %arg0, %c0_i32, %c0_i32_0 : i32, i32, i32
  }
}

</mosaic_0001>

<llo_original>
// kernel: tpu_custom_call.1
$region0: #{tpu_custom_call.1}
  #allocation0 [shape = 'u32[]', space=smem, size = 0x4, offset = 0x4, fixed_abs, tag = 'smem constant byte address 0x4 - core index']
  #allocation1 [shape = 'u32[144,128]{1,0:T(1,128)}', space=vmem, size = 0x12000, scoped, tag = 'internal scratch']
  %s0 = inlined_call_operand.hbm [shape: f32[4,8,128], index: 0, kind: input, shape index: {}]
  %s1 = inlined_call_operand.vmem [shape: f32[128,128], index: 1, kind: input, shape index: {}]
  %s2 = inlined_call_operand.vmem [shape: f32[1,128], index: 2, kind: input, shape index: {}]
  %s3 = inlined_call_operand.vmem [shape: f32[128,128], index: 3, kind: input, shape index: {}]
  %s4 = inlined_call_operand.vmem [shape: f32[1,128], index: 4, kind: input, shape index: {}]
  %s5 = inlined_call_operand.vmem [shape: f32[128,8], index: 5, kind: input, shape index: {}]
  %s6 = inlined_call_operand.vmem [shape: f32[128,1], index: 6, kind: input, shape index: {}]
  %s7 = inlined_call_operand.vmem [shape: f32[8,128], index: 7, kind: input, shape index: {}]
  %s8 = inlined_call_operand.vmem [shape: f32[8,1], index: 8, kind: input, shape index: {}]
  %s9 = inlined_call_operand.hbm [shape: f32[4,8,128], index: 9, kind: output, shape index: {}]
  %s10 = sld [smem:[#allocation0]]
  $region73: #{tpu_custom_call.1} parent=0
    _
  %s12 = ssub.s32 1, %s10
  %s13 = scalar_select 0, %s12, %s10
  $region1: #{tpu_custom_call.1} parent=0
    #allocation2 [shape = 'u8[16384]{0}', space=vmem, size = 0x4000, scoped, tag = 'input window, operand 0']
    #allocation3 [shape = 's32[2]{0}', space=sflag, size = 0x8, scoped, tag = 'scoped memory for tpu_custom_call.1']
    #allocation4 [shape = 's32[2]{0}', space=sflag, size = 0x8, scoped, tag = 'scoped memory for tpu_custom_call.1']
    #allocation5 [shape = 'u8[16384]{0}', space=vmem, size = 0x4000, scoped, tag = 'output window, operand 0']
    %14 = vsyncpa [#allocation3], 0
    %s15 = scalar_lea.sflag [#allocation3], 1
    %16 = vsyncpa %s15, 0
    %17 = vsyncpa [#allocation4], 0
    %s18 = scalar_lea.sflag [#allocation4], 1
    %19 = vsyncpa %s18, 0
    loop: start=0, step=1, limit=4
    $region2: #{tpu_custom_call.1} parent=1 // loop_pre_header
      _
    $region3: #{tpu_custom_call.1} parent=1 // loop_header
      %s21 = sphi 0, %s25
      %p22 = scmp.ge.s32.totalorder %s21, 4
      %s31 = sphi 0, %s33
      %s34 = sphi 0, %s31
      %s35 = sphi 0, %s34
      %s51 = sphi 0, %s35
      %s55 = sphi 0, %s55
      %s57 = sphi 0, %s55
      %s58 = sphi 0, %s57
      %s72 = sphi 0, %s58
      %s76 = sphi 0, %s76
      %s78 = sphi 0, %s76
      %s79 = sphi 0, %s78
      %s93 = sphi 0, %s79
      %s97 = sphi 0, %s97
      %s99 = sphi 0, %s97
      %s100 = sphi 0, %s99
      %s114 = sphi 0, %s100
      %s118 = sphi 0, %s118
      %s120 = sphi 0, %s118
      %s121 = sphi 0, %s120
      %s135 = sphi 0, %s121
      %s139 = sphi 0, %s139
      %s141 = sphi 0, %s139
      %s142 = sphi 0, %s141
      %s156 = sphi 0, %s142
      %s160 = sphi 0, %s160
      %s162 = sphi 0, %s160
      %s163 = sphi 0, %s162
      %s177 = sphi 0, %s163
      %s181 = sphi 0, %s181
      %s183 = sphi 0, %s181
      %s184 = sphi 0, %s183
      %s198 = sphi 0, %s184
      %s202 = sphi 0, %s202
      %s204 = sphi 0, %s202
      %s205 = sphi 0, %s204
      %s219 = sphi 0, %s205
      %s225 = sphi 0, %s227
      %s228 = sphi 0, %s225
      %s229 = sphi 0, %s228
      %s245 = sphi 0, %s229
    $region4: #{tpu_custom_call.1} parent=1 // loop_header_branch
      %24 = sbr.rel (%p22) target = $region8
    $region5: #{tpu_custom_call.1} parent=1 // loop_body
      %s26 = ssub.s32 %s21, 1
      %s27 = ssub.s32 %s21, 2
      %s28 = sadd.s32 %s21, 1
      %s29 = ssub.s32 %s21, %s28
      %p30 = scmp.eq.s32.totalorder %s29, 0
      %s32 = sadd.s32 %s31, 1
      %s33 = scalar_select %p30, %s31, %s32
      %p36 = pneg %p30
      %p37 = scmp.eq.s32.totalorder %s21, 1
      %p38 = por %p36, %p37
      %p39 = scmp.ne.s32.totalorder %s31, %s34
      %p40 = scmp.eq.s32.totalorder %s21, 0
      %p41 = por %p39, %p40
      %p42 = scmp.ne.s32.totalorder %s31, %s34
      %p43 = scmp.eq.s32.totalorder %s26, 1
      %p44 = por %p42, %p43
      %p45 = scmp.ne.s32.totalorder %s34, %s35
      %p46 = scmp.eq.s32.totalorder %s26, 0
      %p47 = por %p45, %p46
      %p48 = scmp.ne.s32.totalorder %s34, %s35
      %p49 = scmp.eq.s32.totalorder %s27, 1
      %p50 = por %p48, %p49
      %p52 = scmp.ne.s32.totalorder %s35, %s51
      %p53 = scmp.eq.s32.totalorder %s27, 0
      %p54 = por %p52, %p53
      %s56 = sadd.s32 %s55, 1
      %p59 = scmp.eq.s32.totalorder %s21, 1
      %p60 = scmp.ne.s32.totalorder %s55, %s57
      %p61 = scmp.eq.s32.totalorder %s21, 0
      %p62 = por %p60, %p61
      %p63 = scmp.ne.s32.totalorder %s55, %s57
      %p64 = scmp.eq.s32.totalorder %s26, 1
      %p65 = por %p63, %p64
      %p66 = scmp.ne.s32.totalorder %s57, %s58
      %p67 = scmp.eq.s32.totalorder %s26, 0
      %p68 = por %p66, %p67
      %p69 = scmp.ne.s32.totalorder %s57, %s58
      %p70 = scmp.eq.s32.totalorder %s27, 1
      %p71 = por %p69, %p70
      %p73 = scmp.ne.s32.totalorder %s58, %s72
      %p74 = scmp.eq.s32.totalorder %s27, 0
      %p75 = por %p73, %p74
      %s77 = sadd.s32 %s76, 1
      %p80 = scmp.eq.s32.totalorder %s21, 1
      %p81 = scmp.ne.s32.totalorder %s76, %s78
      %p82 = scmp.eq.s32.totalorder %s21, 0
      %p83 = por %p81, %p82
      %p84 = scmp.ne.s32.totalorder %s76, %s78
      %p85 = scmp.eq.s32.totalorder %s26, 1
      %p86 = por %p84, %p85
      %p87 = scmp.ne.s32.totalorder %s78, %s79
      %p88 = scmp.eq.s32.totalorder %s26, 0
      %p89 = por %p87, %p88
      %p90 = scmp.ne.s32.totalorder %s78, %s79
      %p91 = scmp.eq.s32.totalorder %s27, 1
      %p92 = por %p90, %p91
      %p94 = scmp.ne.s32.totalorder %s79, %s93
      %p95 = scmp.eq.s32.totalorder %s27, 0
      %p96 = por %p94, %p95
      %s98 = sadd.s32 %s97, 1
      %p101 = scmp.eq.s32.totalorder %s21, 1
      %p102 = scmp.ne.s32.totalorder %s97, %s99
      %p103 = scmp.eq.s32.totalorder %s21, 0
      %p104 = por %p102, %p103
      %p105 = scmp.ne.s32.totalorder %s97, %s99
      %p106 = scmp.eq.s32.totalorder %s26, 1
      %p107 = por %p105, %p106
      %p108 = scmp.ne.s32.totalorder %s99, %s100
      %p109 = scmp.eq.s32.totalorder %s26, 0
      %p110 = por %p108, %p109
      %p111 = scmp.ne.s32.totalorder %s99, %s100
      %p112 = scmp.eq.s32.totalorder %s27, 1
      %p113 = por %p111, %p112
      %p115 = scmp.ne.s32.totalorder %s100, %s114
      %p116 = scmp.eq.s32.totalorder %s27, 0
      %p117 = por %p115, %p116
      %s119 = sadd.s32 %s118, 1
      %p122 = scmp.eq.s32.totalorder %s21, 1
      %p123 = scmp.ne.s32.totalorder %s118, %s120
      %p124 = scmp.eq.s32.totalorder %s21, 0
      %p125 = por %p123, %p124
      %p126 = scmp.ne.s32.totalorder %s118, %s120
      %p127 = scmp.eq.s32.totalorder %s26, 1
      %p128 = por %p126, %p127
      %p129 = scmp.ne.s32.totalorder %s120, %s121
      %p130 = scmp.eq.s32.totalorder %s26, 0
      %p131 = por %p129, %p130
      %p132 = scmp.ne.s32.totalorder %s120, %s121
      %p133 = scmp.eq.s32.totalorder %s27, 1
      %p134 = por %p132, %p133
      %p136 = scmp.ne.s32.totalorder %s121, %s135
      %p137 = scmp.eq.s32.totalorder %s27, 0
      %p138 = por %p136, %p137
      %s140 = sadd.s32 %s139, 1
      %p143 = scmp.eq.s32.totalorder %s21, 1
      %p144 = scmp.ne.s32.totalorder %s139, %s141
      %p145 = scmp.eq.s32.totalorder %s21, 0
      %p146 = por %p144, %p145
      %p147 = scmp.ne.s32.totalorder %s139, %s141
      %p148 = scmp.eq.s32.totalorder %s26, 1
      %p149 = por %p147, %p148
      %p150 = scmp.ne.s32.totalorder %s141, %s142
      %p151 = scmp.eq.s32.totalorder %s26, 0
      %p152 = por %p150, %p151
      %p153 = scmp.ne.s32.totalorder %s141, %s142
      %p154 = scmp.eq.s32.totalorder %s27, 1
      %p155 = por %p153, %p154
      %p157 = scmp.ne.s32.totalorder %s142, %s156
      %p158 = scmp.eq.s32.totalorder %s27, 0
      %p159 = por %p157, %p158
      %s161 = sadd.s32 %s160, 1
      %p164 = scmp.eq.s32.totalorder %s21, 1
      %p165 = scmp.ne.s32.totalorder %s160, %s162
      %p166 = scmp.eq.s32.totalorder %s21, 0
      %p167 = por %p165, %p166
      %p168 = scmp.ne.s32.totalorder %s160, %s162
      %p169 = scmp.eq.s32.totalorder %s26, 1
      %p170 = por %p168, %p169
      %p171 = scmp.ne.s32.totalorder %s162, %s163
      %p172 = scmp.eq.s32.totalorder %s26, 0
      %p173 = por %p171, %p172
      %p174 = scmp.ne.s32.totalorder %s162, %s163
      %p175 = scmp.eq.s32.totalorder %s27, 1
      %p176 = por %p174, %p175
      %p178 = scmp.ne.s32.totalorder %s163, %s177
      %p179 = scmp.eq.s32.totalorder %s27, 0
      %p180 = por %p178, %p179
      %s182 = sadd.s32 %s181, 1
      %p185 = scmp.eq.s32.totalorder %s21, 1
      %p186 = scmp.ne.s32.totalorder %s181, %s183
      %p187 = scmp.eq.s32.totalorder %s21, 0
      %p188 = por %p186, %p187
      %p189 = scmp.ne.s32.totalorder %s181, %s183
      %p190 = scmp.eq.s32.totalorder %s26, 1
      %p191 = por %p189, %p190
      %p192 = scmp.ne.s32.totalorder %s183, %s184
      %p193 = scmp.eq.s32.totalorder %s26, 0
      %p194 = por %p192, %p193
      %p195 = scmp.ne.s32.totalorder %s183, %s184
      %p196 = scmp.eq.s32.totalorder %s27, 1
      %p197 = por %p195, %p196
      %p199 = scmp.ne.s32.totalorder %s184, %s198
      %p200 = scmp.eq.s32.totalorder %s27, 0
      %p201 = por %p199, %p200
      %s203 = sadd.s32 %s202, 1
      %p206 = scmp.eq.s32.totalorder %s21, 1
      %p207 = scmp.ne.s32.totalorder %s202, %s204
      %p208 = scmp.eq.s32.totalorder %s21, 0
      %p209 = por %p207, %p208
      %p210 = scmp.ne.s32.totalorder %s202, %s204
      %p211 = scmp.eq.s32.totalorder %s26, 1
      %p212 = por %p210, %p211
      %p213 = scmp.ne.s32.totalorder %s204, %s205
      %p214 = scmp.eq.s32.totalorder %s26, 0
      %p215 = por %p213, %p214
      %p216 = scmp.ne.s32.totalorder %s204, %s205
      %p217 = scmp.eq.s32.totalorder %s27, 1
      %p218 = por %p216, %p217
      %p220 = scmp.ne.s32.totalorder %s205, %s219
      %p221 = scmp.eq.s32.totalorder %s27, 0
      %p222 = por %p220, %p221
      %s223 = ssub.s32 %s21, %s28
      %p224 = scmp.eq.s32.totalorder %s223, 0
      %s226 = sadd.s32 %s225, 1
      %s227 = scalar_select %p224, %s225, %s226
      %p230 = pneg %p224
      %p231 = scmp.eq.s32.totalorder %s21, 1
      %p232 = por %p230, %p231
      %p233 = scmp.ne.s32.totalorder %s225, %s228
      %p234 = scmp.eq.s32.totalorder %s21, 0
      %p235 = por %p233, %p234
      %p236 = scmp.ne.s32.totalorder %s225, %s228
      %p237 = scmp.eq.s32.totalorder %s26, 1
      %p238 = por %p236, %p237
      %p239 = scmp.ne.s32.totalorder %s228, %s229
      %p240 = scmp.eq.s32.totalorder %s26, 0
      %p241 = por %p239, %p240
      %p242 = scmp.ne.s32.totalorder %s228, %s229
      %p243 = scmp.eq.s32.totalorder %s27, 1
      %p244 = por %p242, %p243
      %p246 = scmp.ne.s32.totalorder %s229, %s245
      %p247 = scmp.eq.s32.totalorder %s27, 0
      %p248 = por %p246, %p247
      %p249 = scmp.le.s32.totalorder 1, %s21
      %p250 = scmp.lt.s32.totalorder %s21, 3
      %p251 = pnand %p249, %p250
      %p252 = pneg %p251
      // Predicated region
      $region9: #{tpu_custom_call.1} parent=5 // pred_check
        _
      $region10: #{tpu_custom_call.1} parent=5 // pred_check_branch
        %254 = sbr.rel (%p251) target = $region12
      $region11: #{tpu_custom_call.1} parent=5 // pred_region
        %s255 = ssub.s32 %s21, 1
        // Predicated region
        $region13: #{tpu_custom_call.1} parent=11 // pred_check
          %p256 = pneg %p68
        $region14: #{tpu_custom_call.1} parent=11 // pred_check_branch
          %258 = sbr.rel (%p256) target = $region16
        $region15: #{tpu_custom_call.1} parent=11 // pred_region
          _
        $region16: #{tpu_custom_call.1} parent=11 // pred_fallthru
          _
        // Predicated region
        $region17: #{tpu_custom_call.1} parent=11 // pred_check
          %p259 = pneg %p89
        $region18: #{tpu_custom_call.1} parent=11 // pred_check_branch
          %261 = sbr.rel (%p259) target = $region20
        $region19: #{tpu_custom_call.1} parent=11 // pred_region
          _
        $region20: #{tpu_custom_call.1} parent=11 // pred_fallthru
          _
        // Predicated region
        $region21: #{tpu_custom_call.1} parent=11 // pred_check
          %p262 = pneg %p110
        $region22: #{tpu_custom_call.1} parent=11 // pred_check_branch
          %264 = sbr.rel (%p262) target = $region24
        $region23: #{tpu_custom_call.1} parent=11 // pred_region
          _
        $region24: #{tpu_custom_call.1} parent=11 // pred_fallthru
          _
        // Predicated region
        $region25: #{tpu_custom_call.1} parent=11 // pred_check
          %p265 = pneg %p131
        $region26: #{tpu_custom_call.1} parent=11 // pred_check_branch
          %267 = sbr.rel (%p265) target = $region28
        $region27: #{tpu_custom_call.1} parent=11 // pred_region
          _
        $region28: #{tpu_custom_call.1} parent=11 // pred_fallthru
          _
        // Predicated region
        $region29: #{tpu_custom_call.1} parent=11 // pred_check
          %p268 = pneg %p152
        $region30: #{tpu_custom_call.1} parent=11 // pred_check_branch
          %270 = sbr.rel (%p268) target = $region32
        $region31: #{tpu_custom_call.1} parent=11 // pred_region
          _
        $region32: #{tpu_custom_call.1} parent=11 // pred_fallthru
          _
        // Predicated region
        $region33: #{tpu_custom_call.1} parent=11 // pred_check
          %p271 = pneg %p173
        $region34: #{tpu_custom_call.1} parent=11 // pred_check_branch
          %273 = sbr.rel (%p271) target = $region36
        $region35: #{tpu_custom_call.1} parent=11 // pred_region
          _
        $region36: #{tpu_custom_call.1} parent=11 // pred_fallthru
          _
        // Predicated region
        $region37: #{tpu_custom_call.1} parent=11 // pred_check
          %p274 = pneg %p194
        $region38: #{tpu_custom_call.1} parent=11 // pred_check_branch
          %276 = sbr.rel (%p274) target = $region40
        $region39: #{tpu_custom_call.1} parent=11 // pred_region
          _
        $region40: #{tpu_custom_call.1} parent=11 // pred_fallthru
          _
        // Predicated region
        $region41: #{tpu_custom_call.1} parent=11 // pred_check
          %p277 = pneg %p215
        $region42: #{tpu_custom_call.1} parent=11 // pred_check_branch
          %279 = sbr.rel (%p277) target = $region44
        $region43: #{tpu_custom_call.1} parent=11 // pred_region
          _
        $region44: #{tpu_custom_call.1} parent=11 // pred_fallthru
          _
      $region12: #{tpu_custom_call.1} parent=5 // pred_fallthru
        _
      %p280 = scmp.lt.s32.totalorder %s21, 2
      // Predicated region
      $region45: #{tpu_custom_call.1} parent=5 // pred_check
        %p281 = pneg %p280
      $region46: #{tpu_custom_call.1} parent=5 // pred_check_branch
        %283 = sbr.rel (%p281) target = $region48
      $region47: #{tpu_custom_call.1} parent=5 // pred_region
        // Predicated region
        $region49: #{tpu_custom_call.1} parent=47 // pred_check
          %p284 = pneg %p41
        $region50: #{tpu_custom_call.1} parent=47 // pred_check_branch
          %286 = sbr.rel (%p284) target = $region52
        $region51: #{tpu_custom_call.1} parent=47 // pred_region
          %s287 = sand.u32 %s31, 1
          %s288 = scalar_lea.sflag [#allocation3], %s287
          %s289 = sand.u32 %s31, 1
          %s290 = smul.addr %s289, 16
          %s291 = scalar_lea.vmem [#allocation2], %s290
          %s292 = smul.u32 2, %s21
          %s294 = ssub.s32 256, 256
          %295 = vsyncadd %s288, %s294
          %s296 = smul.addr %s292, 128
          %s297 = scalar_lea.hbm %s0, %s296
          %s298 = sshll.u32 %s291, 4
          %s299 = int_to_ptr.vmem [resolvable:$true] %s298
          %304 = dma.hbm_to_vmem [thread:$0]  %s297, 256, %s299, %s288, 128, 128, 8
        $region52: #{tpu_custom_call.1} parent=47 // pred_fallthru
          _
      $region48: #{tpu_custom_call.1} parent=5 // pred_fallthru
        _
      %p305 = scmp.le.s32.totalorder 1, %s21
      %p306 = scmp.lt.s32.totalorder %s21, 3
      %p307 = pnand %p305, %p306
      %p308 = pneg %p307
      // Predicated region
      $region53: #{tpu_custom_call.1} parent=5 // pred_check
        _
      $region54: #{tpu_custom_call.1} parent=5 // pred_check_branch
        %310 = sbr.rel (%p307) target = $region56
      $region55: #{tpu_custom_call.1} parent=5 // pred_region
        %s311 = ssub.s32 %s21, 1
        %s312 = sand.u32 %s34, 1
        %s313 = scalar_lea.sflag [#allocation3], %s312
        %s314 = sand.u32 %s34, 1
        %s315 = smul.addr %s314, 16
        %s316 = scalar_lea.vmem [#allocation2], %s315
        // Predicated region
        $region57: #{tpu_custom_call.1} parent=55 // pred_check
          %p317 = pneg %p47
        $region58: #{tpu_custom_call.1} parent=55 // pred_check_branch
          %319 = sbr.rel (%p317) target = $region60
        $region59: #{tpu_custom_call.1} parent=55 // pred_region
          %320 = dma.done %s313, 256
        $region60: #{tpu_custom_call.1} parent=55 // pred_fallthru
          _
        %s321 = sand.u32 %s34, 1
        %s322 = scalar_lea.sflag [#allocation3], %s321
        %s323 = sand.u32 %s34, 1
        %s324 = smul.addr %s323, 16
        %s325 = scalar_lea.vmem [#allocation2], %s324
        %p326 = pneg %p47
        %p327 = pneg %p44
        %p328 = pneg %p68
        %p329 = pneg %p65
        %p330 = pneg %p89
        %p331 = pneg %p86
        %p332 = pneg %p110
        %p333 = pneg %p107
        %p334 = pneg %p131
        %p335 = pneg %p128
        %p336 = pneg %p152
        %p337 = pneg %p149
        %p338 = pneg %p173
        %p339 = pneg %p170
        %p340 = pneg %p194
        %p341 = pneg %p191
        %p342 = pneg %p215
        %p343 = pneg %p212
        %p344 = pneg %p241
        %p345 = pneg %p238
        %s346 = sand.u32 %s228, 1
        %s347 = scalar_lea.sflag [#allocation4], %s346
        %s348 = sand.u32 %s228, 1
        %s349 = smul.addr %s348, 16
        %s350 = scalar_lea.vmem [#allocation5], %s349
        %s351 = smul.u32 2, %s26
        %s352 = smul.u32 2, %s26
        %v353 = vld [vmem:[%s1] sm:$0xff]
        %v354 = vld [vmem:[%s1 + $0x8] sm:$0xff]
        %v355 = vld [vmem:[%s1 + $0x10] sm:$0xff]
        %v356 = vld [vmem:[%s1 + $0x18] sm:$0xff]
        %v357 = vld [vmem:[%s1 + $0x20] sm:$0xff]
        %v358 = vld [vmem:[%s1 + $0x28] sm:$0xff]
        %v359 = vld [vmem:[%s1 + $0x30] sm:$0xff]
        %v360 = vld [vmem:[%s1 + $0x38] sm:$0xff]
        %v361 = vld [vmem:[%s1 + $0x40] sm:$0xff]
        %v362 = vld [vmem:[%s1 + $0x48] sm:$0xff]
        %v363 = vld [vmem:[%s1 + $0x50] sm:$0xff]
        %v364 = vld [vmem:[%s1 + $0x58] sm:$0xff]
        %v365 = vld [vmem:[%s1 + $0x60] sm:$0xff]
        %v366 = vld [vmem:[%s1 + $0x68] sm:$0xff]
        %v367 = vld [vmem:[%s1 + $0x70] sm:$0xff]
        %v368 = vld [vmem:[%s1 + $0x78] sm:$0xff]
        %v369 = vld [vmem:[%s3] sm:$0xff]
        %v370 = vld [vmem:[%s3 + $0x8] sm:$0xff]
        %v371 = vld [vmem:[%s3 + $0x10] sm:$0xff]
        %v372 = vld [vmem:[%s3 + $0x18] sm:$0xff]
        %v373 = vld [vmem:[%s3 + $0x20] sm:$0xff]
        %v374 = vld [vmem:[%s3 + $0x28] sm:$0xff]
        %v375 = vld [vmem:[%s3 + $0x30] sm:$0xff]
        %v376 = vld [vmem:[%s3 + $0x38] sm:$0xff]
        %v377 = vld [vmem:[%s3 + $0x40] sm:$0xff]
        %v378 = vld [vmem:[%s3 + $0x48] sm:$0xff]
        %v379 = vld [vmem:[%s3 + $0x50] sm:$0xff]
        %v380 = vld [vmem:[%s3 + $0x58] sm:$0xff]
        %v381 = vld [vmem:[%s3 + $0x60] sm:$0xff]
        %v382 = vld [vmem:[%s3 + $0x68] sm:$0xff]
        %v383 = vld [vmem:[%s3 + $0x70] sm:$0xff]
        %v384 = vld [vmem:[%s3 + $0x78] sm:$0xff]
        %v385 = vld [vmem:[%s2] sm:$0x1]
        %v386 = vld [vmem:[%s4] sm:$0x1]
        %v387 = vld [vmem:[%s5] sm:$0xff]
        %v388 = vld [vmem:[%s5 + $0x8] sm:$0xff]
        %v389 = vld [vmem:[%s5 + $0x10] sm:$0xff]
        %v390 = vld [vmem:[%s5 + $0x18] sm:$0xff]
        %v391 = vld [vmem:[%s5 + $0x20] sm:$0xff]
        %v392 = vld [vmem:[%s5 + $0x28] sm:$0xff]
        %v393 = vld [vmem:[%s5 + $0x30] sm:$0xff]
        %v394 = vld [vmem:[%s5 + $0x38] sm:$0xff]
        %v395 = vld [vmem:[%s5 + $0x40] sm:$0xff]
        %v396 = vld [vmem:[%s5 + $0x48] sm:$0xff]
        %v397 = vld [vmem:[%s5 + $0x50] sm:$0xff]
        %v398 = vld [vmem:[%s5 + $0x58] sm:$0xff]
        %v399 = vld [vmem:[%s5 + $0x60] sm:$0xff]
        %v400 = vld [vmem:[%s5 + $0x68] sm:$0xff]
        %v401 = vld [vmem:[%s5 + $0x70] sm:$0xff]
        %v402 = vld [vmem:[%s5 + $0x78] sm:$0xff]
        %v403 = vld [vmem:[%s7] sm:$0xff]
        %v404 = vld [vmem:[%s6] sm:$0xff]
        %v405 = vld [vmem:[%s6 + $0x8] sm:$0xff]
        %v406 = vld [vmem:[%s6 + $0x10] sm:$0xff]
        %v407 = vld [vmem:[%s6 + $0x18] sm:$0xff]
        %v408 = vld [vmem:[%s6 + $0x20] sm:$0xff]
        %v409 = vld [vmem:[%s6 + $0x28] sm:$0xff]
        %v410 = vld [vmem:[%s6 + $0x30] sm:$0xff]
        %v411 = vld [vmem:[%s6 + $0x38] sm:$0xff]
        %v412 = vld [vmem:[%s6 + $0x40] sm:$0xff]
        %v413 = vld [vmem:[%s6 + $0x48] sm:$0xff]
        %v414 = vld [vmem:[%s6 + $0x50] sm:$0xff]
        %v415 = vld [vmem:[%s6 + $0x58] sm:$0xff]
        %v416 = vld [vmem:[%s6 + $0x60] sm:$0xff]
        %v417 = vld [vmem:[%s6 + $0x68] sm:$0xff]
        %v418 = vld [vmem:[%s6 + $0x70] sm:$0xff]
        %v419 = vld [vmem:[%s6 + $0x78] sm:$0xff]
        %v420 = vld [vmem:[%s8] sm:$0xff]
        %v421 = vld [vmem:[%s316] sm:$0xff]
        %v422 = vld [vmem:[%s316 + $0x8] sm:$0xff]
        %v424 = vlaneseq
        %v425 = vshrl.u32 %v424, 7
        %v426 = vsub.s32 0, %v425
        %v427 = vrot.slane %v385, %v426
        %429 = vmatprep.subr.mxu0 0.0
        %430 = vmatpush1.msra.mxu0 %v353
        %431 = vmatprep.subr.mxu0 0.0
        %432 = vmatpush1.msra.mxu0 %v354
        %433 = vmatprep.subr.mxu0 0.0
        %434 = vmatpush1.msra.mxu0 %v355
        %435 = vmatprep.subr.mxu0 0.0
        %436 = vmatpush1.msra.mxu0 %v356
        %437 = vmatprep.subr.mxu0 0.0
        %438 = vmatpush1.msra.mxu0 %v357
        %439 = vmatprep.subr.mxu0 0.0
        %440 = vmatpush1.msra.mxu0 %v358
        %441 = vmatprep.subr.mxu0 0.0
        %442 = vmatpush1.msra.mxu0 %v359
        %443 = vmatprep.subr.mxu0 0.0
        %444 = vmatpush1.msra.mxu0 %v360
        %445 = vmatprep.subr.mxu0 0.0
        %446 = vmatpush1.msra.mxu0 %v361
        %447 = vmatprep.subr.mxu0 0.0
        %448 = vmatpush1.msra.mxu0 %v362
        %449 = vmatprep.subr.mxu0 0.0
        %450 = vmatpush1.msra.mxu0 %v363
        %451 = vmatprep.subr.mxu0 0.0
        %452 = vmatpush1.msra.mxu0 %v364
        %453 = vmatprep.subr.mxu0 0.0
        %454 = vmatpush1.msra.mxu0 %v365
        %455 = vmatprep.subr.mxu0 0.0
        %456 = vmatpush1.msra.mxu0 %v366
        %457 = vmatprep.subr.mxu0 0.0
        %458 = vmatpush1.msra.mxu0 %v367
        %459 = vmatprep.subr.mxu0 0.0
        %460 = vmatpush1.msra.mxu0 %v368
        %461 = vmatprep.subr.mxu0 0.0
        %462 = vmatpush1.msra.mxu0 0.0
        %463 = vmatprep.subr.mxu0 0.0
        %464 = vmatpush1.msra.mxu0 0.0
        %465 = vmatprep.subr.mxu0 0.0
        %466 = vmatpush1.msra.mxu0 0.0
        %467 = vmatprep.subr.mxu0 0.0
        %468 = vmatpush1.msra.mxu0 0.0
        %469 = vmatprep.subr.mxu0 0.0
        %470 = vmatpush1.msra.mxu0 0.0
        %471 = vmatprep.subr.mxu0 0.0
        %472 = vmatpush1.msra.mxu0 0.0
        %473 = vmatprep.subr.mxu0 0.0
        %474 = vmatpush1.msra.mxu0 0.0
        %475 = vmatprep.subr.mxu0 0.0
        %476 = vmatpush1.msra.mxu0 0.0
        %477 = vmatprep.subr.mxu0 0.0
        %478 = vmatpush1.msra.mxu0 0.0
        %479 = vmatprep.subr.mxu0 0.0
        %480 = vmatpush1.msra.mxu0 0.0
        %481 = vmatprep.subr.mxu0 0.0
        %482 = vmatpush1.msra.mxu0 0.0
        %483 = vmatprep.subr.mxu0 0.0
        %484 = vmatpush1.msra.mxu0 0.0
        %485 = vmatprep.subr.mxu0 0.0
        %486 = vmatpush1.msra.mxu0 0.0
        %487 = vmatprep.subr.mxu0 0.0
        %488 = vmatpush1.msra.mxu0 0.0
        %489 = vmatprep.subr.mxu0 0.0
        %490 = vmatpush1.msra.mxu0 0.0
        %491 = vmatprep.subr.mxu0 0.0
        %492 = vmatpush1.msra.mxu0 0.0
        %493 = vmatprep.mubr.f32.mxu0 0.0
        %494 = vmatmul.mubr.f32.gmra.mrb[0].mxu0 %v421
        %v495 = vpop.f32.mrb[0].mxu0
        %v496 = vadd.f32 %v427, %v495
        %v497 = vpop.f32.mrb[0].mxu0
        %498 = vmatprep.mubr.f32.mxu0 0.0
        %499 = vmatmul.mubr.f32.gmra.mrb[0].mxu0 %v422
        %v500 = vpop.f32.mrb[0].mxu0
        %v501 = vadd.f32 %v427, %v500
        %v502 = vpop.f32.mrb[0].mxu0
        %503 = vdwg.mxu0
        %v504 = vmax.f32 %v496, 0.0
        %v505 = vmax.f32 %v501, 0.0
        %v507 = vlaneseq
        %v508 = vshrl.u32 %v507, 7
        %v509 = vsub.s32 0, %v508
        %v510 = vrot.slane %v386, %v509
        %512 = vmatprep.subr.mxu0 0.0
        %513 = vmatpush1.msra.mxu0 %v369
        %514 = vmatprep.subr.mxu0 0.0
        %515 = vmatpush1.msra.mxu0 %v370
        %516 = vmatprep.subr.mxu0 0.0
        %517 = vmatpush1.msra.mxu0 %v371
        %518 = vmatprep.subr.mxu0 0.0
        %519 = vmatpush1.msra.mxu0 %v372
        %520 = vmatprep.subr.mxu0 0.0
        %521 = vmatpush1.msra.mxu0 %v373
        %522 = vmatprep.subr.mxu0 0.0
        %523 = vmatpush1.msra.mxu0 %v374
        %524 = vmatprep.subr.mxu0 0.0
        %525 = vmatpush1.msra.mxu0 %v375
        %526 = vmatprep.subr.mxu0 0.0
        %527 = vmatpush1.msra.mxu0 %v376
        %528 = vmatprep.subr.mxu0 0.0
        %529 = vmatpush1.msra.mxu0 %v377
        %530 = vmatprep.subr.mxu0 0.0
        %531 = vmatpush1.msra.mxu0 %v378
        %532 = vmatprep.subr.mxu0 0.0
        %533 = vmatpush1.msra.mxu0 %v379
        %534 = vmatprep.subr.mxu0 0.0
        %535 = vmatpush1.msra.mxu0 %v380
        %536 = vmatprep.subr.mxu0 0.0
        %537 = vmatpush1.msra.mxu0 %v381
        %538 = vmatprep.subr.mxu0 0.0
        %539 = vmatpush1.msra.mxu0 %v382
        %540 = vmatprep.subr.mxu0 0.0
        %541 = vmatpush1.msra.mxu0 %v383
        %542 = vmatprep.subr.mxu0 0.0
        %543 = vmatpush1.msra.mxu0 %v384
        %544 = vmatprep.subr.mxu0 0.0
        %545 = vmatpush1.msra.mxu0 0.0
        %546 = vmatprep.subr.mxu0 0.0
        %547 = vmatpush1.msra.mxu0 0.0
        %548 = vmatprep.subr.mxu0 0.0
        %549 = vmatpush1.msra.mxu0 0.0
        %550 = vmatprep.subr.mxu0 0.0
        %551 = vmatpush1.msra.mxu0 0.0
        %552 = vmatprep.subr.mxu0 0.0
        %553 = vmatpush1.msra.mxu0 0.0
        %554 = vmatprep.subr.mxu0 0.0
        %555 = vmatpush1.msra.mxu0 0.0
        %556 = vmatprep.subr.mxu0 0.0
        %557 = vmatpush1.msra.mxu0 0.0
        %558 = vmatprep.subr.mxu0 0.0
        %559 = vmatpush1.msra.mxu0 0.0
        %560 = vmatprep.subr.mxu0 0.0
        %561 = vmatpush1.msra.mxu0 0.0
        %562 = vmatprep.subr.mxu0 0.0
        %563 = vmatpush1.msra.mxu0 0.0
        %564 = vmatprep.subr.mxu0 0.0
        %565 = vmatpush1.msra.mxu0 0.0
        %566 = vmatprep.subr.mxu0 0.0
        %567 = vmatpush1.msra.mxu0 0.0
        %568 = vmatprep.subr.mxu0 0.0
        %569 = vmatpush1.msra.mxu0 0.0
        %570 = vmatprep.subr.mxu0 0.0
        %571 = vmatpush1.msra.mxu0 0.0
        %572 = vmatprep.subr.mxu0 0.0
        %573 = vmatpush1.msra.mxu0 0.0
        %574 = vmatprep.subr.mxu0 0.0
        %575 = vmatpush1.msra.mxu0 0.0
        %576 = vmatprep.mubr.f32.mxu0 0.0
        %577 = vmatmul.mubr.f32.gmra.mrb[0].mxu0 %v504
        %v578 = vpop.f32.mrb[0].mxu0
        %v579 = vadd.f32 %v510, %v578
        %v580 = vpop.f32.mrb[0].mxu0
        %581 = vmatprep.mubr.f32.mxu0 0.0
        %582 = vmatmul.mubr.f32.gmra.mrb[0].mxu0 %v505
        %v583 = vpop.f32.mrb[0].mxu0
        %v584 = vadd.f32 %v510, %v583
        %v585 = vpop.f32.mrb[0].mxu0
        %586 = vdwg.mxu0
        %v587 = vadd.f32 %v421, %v579
        %v588 = vadd.f32 %v422, %v584
        %590 = vset.pattern.permute.xlu0 0
        %591 = vperm.xlu0 %590, %v404
        %v592 = vpop.permute.xlu0 %591
        %595 = vset.pattern.permute.xlu0 0
        %596 = vperm.xlu0 %595, %v405
        %v597 = vpop.permute.xlu0 %596
        %600 = vset.pattern.permute.xlu0 0
        %601 = vperm.xlu0 %600, %v406
        %v602 = vpop.permute.xlu0 %601
        %605 = vset.pattern.permute.xlu0 0
        %606 = vperm.xlu0 %605, %v407
        %v607 = vpop.permute.xlu0 %606
        %610 = vset.pattern.permute.xlu0 0
        %611 = vperm.xlu0 %610, %v408
        %v612 = vpop.permute.xlu0 %611
        %615 = vset.pattern.permute.xlu0 0
        %616 = vperm.xlu0 %615, %v409
        %v617 = vpop.permute.xlu0 %616
        %620 = vset.pattern.permute.xlu0 0
        %621 = vperm.xlu0 %620, %v410
        %v622 = vpop.permute.xlu0 %621
        %625 = vset.pattern.permute.xlu0 0
        %626 = vperm.xlu0 %625, %v411
        %v627 = vpop.permute.xlu0 %626
        %630 = vset.pattern.permute.xlu0 0
        %631 = vperm.xlu0 %630, %v412
        %v632 = vpop.permute.xlu0 %631
        %635 = vset.pattern.permute.xlu0 0
        %636 = vperm.xlu0 %635, %v413
        %v637 = vpop.permute.xlu0 %636
        %640 = vset.pattern.permute.xlu0 0
        %641 = vperm.xlu0 %640, %v414
        %v642 = vpop.permute.xlu0 %641
        %645 = vset.pattern.permute.xlu0 0
        %646 = vperm.xlu0 %645, %v415
        %v647 = vpop.permute.xlu0 %646
        %650 = vset.pattern.permute.xlu0 0
        %651 = vperm.xlu0 %650, %v416
        %v652 = vpop.permute.xlu0 %651
        %655 = vset.pattern.permute.xlu0 0
        %656 = vperm.xlu0 %655, %v417
        %v657 = vpop.permute.xlu0 %656
        %660 = vset.pattern.permute.xlu0 0
        %661 = vperm.xlu0 %660, %v418
        %v662 = vpop.permute.xlu0 %661
        %665 = vset.pattern.permute.xlu0 0
        %666 = vperm.xlu0 %665, %v419
        %v667 = vpop.permute.xlu0 %666
        %vm669 = vcmask 64512
        %v671 = vsel %vm669, %v387, 0
        %v674 = vsel %vm669, %v388, 0
        %v677 = vsel %vm669, %v389, 0
        %v680 = vsel %vm669, %v390, 0
        %v683 = vsel %vm669, %v391, 0
        %v686 = vsel %vm669, %v392, 0
        %v689 = vsel %vm669, %v393, 0
        %v692 = vsel %vm669, %v394, 0
        %v695 = vsel %vm669, %v395, 0
        %v698 = vsel %vm669, %v396, 0
        %v701 = vsel %vm669, %v397, 0
        %v704 = vsel %vm669, %v398, 0
        %v707 = vsel %vm669, %v399, 0
        %v710 = vsel %vm669, %v400, 0
        %v713 = vsel %vm669, %v401, 0
        %v716 = vsel %vm669, %v402, 0
        %718 = vmatprep.subr.mxu0 0.0
        %719 = vmatpush1.msra.mxu0 %v587
        %720 = vmatprep.subr.mxu0 0.0
        %721 = vmatpush1.msra.mxu0 0.0
        %722 = vmatprep.subr.mxu0 0.0
        %723 = vmatpush1.msra.mxu0 0.0
        %724 = vmatprep.subr.mxu0 0.0
        %725 = vmatpush1.msra.mxu0 0.0
        %726 = vmatprep.subr.mxu0 0.0
        %727 = vmatpush1.msra.mxu0 0.0
        %728 = vmatprep.subr.mxu0 0.0
        %729 = vmatpush1.msra.mxu0 0.0
        %730 = vmatprep.subr.mxu0 0.0
        %731 = vmatpush1.msra.mxu0 0.0
        %732 = vmatprep.subr.mxu0 0.0
        %733 = vmatpush1.msra.mxu0 0.0
        %734 = vmatprep.subr.mxu0 0.0
        %735 = vmatpush1.msra.mxu0 0.0
        %736 = vmatprep.subr.mxu0 0.0
        %737 = vmatpush1.msra.mxu0 0.0
        %738 = vmatprep.subr.mxu0 0.0
        %739 = vmatpush1.msra.mxu0 0.0
        %740 = vmatprep.subr.mxu0 0.0
        %741 = vmatpush1.msra.mxu0 0.0
        %742 = vmatprep.subr.mxu0 0.0
        %743 = vmatpush1.msra.mxu0 0.0
        %744 = vmatprep.subr.mxu0 0.0
        %745 = vmatpush1.msra.mxu0 0.0
        %746 = vmatprep.subr.mxu0 0.0
        %747 = vmatpush1.msra.mxu0 0.0
        %748 = vmatprep.subr.mxu0 0.0
        %749 = vmatpush1.msra.mxu0 0.0
        %750 = vmatprep.subr.mxu0 0.0
        %751 = vmatpush1.msra.mxu0 0.0
        %752 = vmatprep.subr.mxu0 0.0
        %753 = vmatpush1.msra.mxu0 0.0
        %754 = vmatprep.subr.mxu0 0.0
        %755 = vmatpush1.msra.mxu0 0.0
        %756 = vmatprep.subr.mxu0 0.0
        %757 = vmatpush1.msra.mxu0 0.0
        %758 = vmatprep.subr.mxu0 0.0
        %759 = vmatpush1.msra.mxu0 0.0
        %760 = vmatprep.subr.mxu0 0.0
        %761 = vmatpush1.msra.mxu0 0.0
        %762 = vmatprep.subr.mxu0 0.0
        %763 = vmatpush1.msra.mxu0 0.0
        %764 = vmatprep.subr.mxu0 0.0
        %765 = vmatpush1.msra.mxu0 0.0
        %766 = vmatprep.subr.mxu0 0.0
        %767 = vmatpush1.msra.mxu0 0.0
        %768 = vmatprep.subr.mxu0 0.0
        %769 = vmatpush1.msra.mxu0 0.0
        %770 = vmatprep.subr.mxu0 0.0
        %771 = vmatpush1.msra.mxu0 0.0
        %772 = vmatprep.subr.mxu0 0.0
        %773 = vmatpush1.msra.mxu0 0.0
        %774 = vmatprep.subr.mxu0 0.0
        %775 = vmatpush1.msra.mxu0 0.0
        %776 = vmatprep.subr.mxu0 0.0
        %777 = vmatpush1.msra.mxu0 0.0
        %778 = vmatprep.subr.mxu0 0.0
        %779 = vmatpush1.msra.mxu0 0.0
        %780 = vmatprep.subr.mxu0 0.0
        %781 = vmatpush1.msra.mxu0 0.0
        %782 = vmatprep.mubr.f32.mxu0 0.0
        %783 = vmatmul.mubr.f32.gmra.mrb[0].mxu0 %v671
        %v784 = vpop.f32.mrb[0].mxu0
        %v785 = vadd.f32 %v592, %v784
        %v786 = vpop.f32.mrb[0].mxu0
        %787 = vmatprep.mubr.f32.mxu0 0.0
        %788 = vmatmul.mubr.f32.gmra.mrb[0].mxu0 %v674
        %v789 = vpop.f32.mrb[0].mxu0
        %v790 = vadd.f32 %v597, %v789
        %v791 = vpop.f32.mrb[0].mxu0
        %792 = vmatprep.mubr.f32.mxu0 0.0
        %793 = vmatmul.mubr.f32.gmra.mrb[0].mxu0 %v677
        %v794 = vpop.f32.mrb[0].mxu0
        %v795 = vadd.f32 %v602, %v794
        %v796 = vpop.f32.mrb[0].mxu0
        %797 = vmatprep.mubr.f32.mxu0 0.0
        %798 = vmatmul.mubr.f32.gmra.mrb[0].mxu0 %v680
        %v799 = vpop.f32.mrb[0].mxu0
        %v800 = vadd.f32 %v607, %v799
        %v801 = vpop.f32.mrb[0].mxu0
        %802 = vmatprep.mubr.f32.mxu0 0.0
        %803 = vmatmul.mubr.f32.gmra.mrb[0].mxu0 %v683
        %v804 = vpop.f32.mrb[0].mxu0
        %v805 = vadd.f32 %v612, %v804
        %v806 = vpop.f32.mrb[0].mxu0
        %807 = vmatprep.mubr.f32.mxu0 0.0
        %808 = vmatmul.mubr.f32.gmra.mrb[0].mxu0 %v686
        %v809 = vpop.f32.mrb[0].mxu0
        %v810 = vadd.f32 %v617, %v809
        %v811 = vpop.f32.mrb[0].mxu0
        %812 = vmatprep.mubr.f32.mxu0 0.0
        %813 = vmatmul.mubr.f32.gmra.mrb[0].mxu0 %v689
        %v814 = vpop.f32.mrb[0].mxu0
        %v815 = vadd.f32 %v622, %v814
        %v816 = vpop.f32.mrb[0].mxu0
        %817 = vmatprep.mubr.f32.mxu0 0.0
        %818 = vmatmul.mubr.f32.gmra.mrb[0].mxu0 %v692
        %v819 = vpop.f32.mrb[0].mxu0
        %v820 = vadd.f32 %v627, %v819
        %v821 = vpop.f32.mrb[0].mxu0
        %822 = vmatprep.mubr.f32.mxu0 0.0
        %823 = vmatmul.mubr.f32.gmra.mrb[0].mxu0 %v695
        %v824 = vpop.f32.mrb[0].mxu0
        %v825 = vadd.f32 %v632, %v824
        %v826 = vpop.f32.mrb[0].mxu0
        %827 = vmatprep.mubr.f32.mxu0 0.0
        %828 = vmatmul.mubr.f32.gmra.mrb[0].mxu0 %v698
        %v829 = vpop.f32.mrb[0].mxu0
        %v830 = vadd.f32 %v637, %v829
        %v831 = vpop.f32.mrb[0].mxu0
        %832 = vmatprep.mubr.f32.mxu0 0.0
        %833 = vmatmul.mubr.f32.gmra.mrb[0].mxu0 %v701
        %v834 = vpop.f32.mrb[0].mxu0
        %v835 = vadd.f32 %v642, %v834
        %v836 = vpop.f32.mrb[0].mxu0
        %837 = vmatprep.mubr.f32.mxu0 0.0
        %838 = vmatmul.mubr.f32.gmra.mrb[0].mxu0 %v704
        %v839 = vpop.f32.mrb[0].mxu0
        %v840 = vadd.f32 %v647, %v839
        %v841 = vpop.f32.mrb[0].mxu0
        %842 = vmatprep.mubr.f32.mxu0 0.0
        %843 = vmatmul.mubr.f32.gmra.mrb[0].mxu0 %v707
        %v844 = vpop.f32.mrb[0].mxu0
        %v845 = vadd.f32 %v652, %v844
        %v846 = vpop.f32.mrb[0].mxu0
        %847 = vmatprep.mubr.f32.mxu0 0.0
        %848 = vmatmul.mubr.f32.gmra.mrb[0].mxu0 %v710
        %v849 = vpop.f32.mrb[0].mxu0
        %v850 = vadd.f32 %v657, %v849
        %v851 = vpop.f32.mrb[0].mxu0
        %852 = vmatprep.mubr.f32.mxu0 0.0
        %853 = vmatmul.mubr.f32.gmra.mrb[0].mxu0 %v713
        %v854 = vpop.f32.mrb[0].mxu0
        %v855 = vadd.f32 %v662, %v854
        %v856 = vpop.f32.mrb[0].mxu0
        %857 = vmatprep.mubr.f32.mxu0 0.0
        %858 = vmatmul.mubr.f32.gmra.mrb[0].mxu0 %v716
        %v859 = vpop.f32.mrb[0].mxu0
        %v860 = vadd.f32 %v667, %v859
        %v861 = vpop.f32.mrb[0].mxu0
        %862 = vdwg.mxu0
        %v863 = vmax.f32 %v785, 0.0
        %v864 = vmax.f32 %v790, 0.0
        %v865 = vmax.f32 %v795, 0.0
        %v866 = vmax.f32 %v800, 0.0
        %v867 = vmax.f32 %v805, 0.0
        %v868 = vmax.f32 %v810, 0.0
        %v869 = vmax.f32 %v815, 0.0
        %v870 = vmax.f32 %v820, 0.0
        %v871 = vmax.f32 %v825, 0.0
        %v872 = vmax.f32 %v830, 0.0
        %v873 = vmax.f32 %v835, 0.0
        %v874 = vmax.f32 %v840, 0.0
        %v875 = vmax.f32 %v845, 0.0
        %v876 = vmax.f32 %v850, 0.0
        %v877 = vmax.f32 %v855, 0.0
        %v878 = vmax.f32 %v860, 0.0
        %880 = vset.pattern.permute.xlu0 0
        %881 = vperm.xlu0 %880, %v420
        %v882 = vpop.permute.xlu0 %881
        %884 = vmatprep.subr.mxu0 0.0
        %885 = vmatpush1.msra.mxu0 %v863
        %886 = vmatprep.subr.mxu0 0.0
        %887 = vmatpush1.msra.mxu0 %v864
        %888 = vmatprep.subr.mxu0 0.0
        %889 = vmatpush1.msra.mxu0 %v865
        %890 = vmatprep.subr.mxu0 0.0
        %891 = vmatpush1.msra.mxu0 %v866
        %892 = vmatprep.subr.mxu0 0.0
        %893 = vmatpush1.msra.mxu0 %v867
        %894 = vmatprep.subr.mxu0 0.0
        %895 = vmatpush1.msra.mxu0 %v868
        %896 = vmatprep.subr.mxu0 0.0
        %897 = vmatpush1.msra.mxu0 %v869
        %898 = vmatprep.subr.mxu0 0.0
        %899 = vmatpush1.msra.mxu0 %v870
        %900 = vmatprep.subr.mxu0 0.0
        %901 = vmatpush1.msra.mxu0 %v871
        %902 = vmatprep.subr.mxu0 0.0
        %903 = vmatpush1.msra.mxu0 %v872
        %904 = vmatprep.subr.mxu0 0.0
        %905 = vmatpush1.msra.mxu0 %v873
        %906 = vmatprep.subr.mxu0 0.0
        %907 = vmatpush1.msra.mxu0 %v874
        %908 = vmatprep.subr.mxu0 0.0
        %909 = vmatpush1.msra.mxu0 %v875
        %910 = vmatprep.subr.mxu0 0.0
        %911 = vmatpush1.msra.mxu0 %v876
        %912 = vmatprep.subr.mxu0 0.0
        %913 = vmatpush1.msra.mxu0 %v877
        %914 = vmatprep.subr.mxu0 0.0
        %915 = vmatpush1.msra.mxu0 %v878
        %916 = vmatprep.subr.mxu0 0.0
        %917 = vmatpush1.msra.mxu0 0.0
        %918 = vmatprep.subr.mxu0 0.0
        %919 = vmatpush1.msra.mxu0 0.0
        %920 = vmatprep.subr.mxu0 0.0
        %921 = vmatpush1.msra.mxu0 0.0
        %922 = vmatprep.subr.mxu0 0.0
        %923 = vmatpush1.msra.mxu0 0.0
        %924 = vmatprep.subr.mxu0 0.0
        %925 = vmatpush1.msra.mxu0 0.0
        %926 = vmatprep.subr.mxu0 0.0
        %927 = vmatpush1.msra.mxu0 0.0
        %928 = vmatprep.subr.mxu0 0.0
        %929 = vmatpush1.msra.mxu0 0.0
        %930 = vmatprep.subr.mxu0 0.0
        %931 = vmatpush1.msra.mxu0 0.0
        %932 = vmatprep.subr.mxu0 0.0
        %933 = vmatpush1.msra.mxu0 0.0
        %934 = vmatprep.subr.mxu0 0.0
        %935 = vmatpush1.msra.mxu0 0.0
        %936 = vmatprep.subr.mxu0 0.0
        %937 = vmatpush1.msra.mxu0 0.0
        %938 = vmatprep.subr.mxu0 0.0
        %939 = vmatpush1.msra.mxu0 0.0
        %940 = vmatprep.subr.mxu0 0.0
        %941 = vmatpush1.msra.mxu0 0.0
        %942 = vmatprep.subr.mxu0 0.0
        %943 = vmatpush1.msra.mxu0 0.0
        %944 = vmatprep.subr.mxu0 0.0
        %945 = vmatpush1.msra.mxu0 0.0
        %946 = vmatprep.subr.mxu0 0.0
        %947 = vmatpush1.msra.mxu0 0.0
        %948 = vmatprep.mubr.f32.mxu0 0.0
        %949 = vmatmul.mubr.f32.gmra.mrb[0].mxu0 %v403
        %v950 = vpop.f32.mrb[0].mxu0
        %v951 = vadd.f32 %v882, %v950
        %v952 = vpop.f32.mrb[0].mxu0
        %953 = vdwg.mxu0
        %v954 = vadd.f32 %v587, %v951
        %955 = vst [vmem:[%s350] sm:$0xff] %v954
        %956 = vmatprep.subr.mxu0 0.0
        %957 = vmatpush1.msra.mxu0 %v588
        %958 = vmatprep.subr.mxu0 0.0
        %959 = vmatpush1.msra.mxu0 0.0
        %960 = vmatprep.subr.mxu0 0.0
        %961 = vmatpush1.msra.mxu0 0.0
        %962 = vmatprep.subr.mxu0 0.0
        %963 = vmatpush1.msra.mxu0 0.0
        %964 = vmatprep.subr.mxu0 0.0
        %965 = vmatpush1.msra.mxu0 0.0
        %966 = vmatprep.subr.mxu0 0.0
        %967 = vmatpush1.msra.mxu0 0.0
        %968 = vmatprep.subr.mxu0 0.0
        %969 = vmatpush1.msra.mxu0 0.0
        %970 = vmatprep.subr.mxu0 0.0
        %971 = vmatpush1.msra.mxu0 0.0
        %972 = vmatprep.subr.mxu0 0.0
        %973 = vmatpush1.msra.mxu0 0.0
        %974 = vmatprep.subr.mxu0 0.0
        %975 = vmatpush1.msra.mxu0 0.0
        %976 = vmatprep.subr.mxu0 0.0
        %977 = vmatpush1.msra.mxu0 0.0
        %978 = vmatprep.subr.mxu0 0.0
        %979 = vmatpush1.msra.mxu0 0.0
        %980 = vmatprep.subr.mxu0 0.0
        %981 = vmatpush1.msra.mxu0 0.0
        %982 = vmatprep.subr.mxu0 0.0
        %983 = vmatpush1.msra.mxu0 0.0
        %984 = vmatprep.subr.mxu0 0.0
        %985 = vmatpush1.msra.mxu0 0.0
        %986 = vmatprep.subr.mxu0 0.0
        %987 = vmatpush1.msra.mxu0 0.0
        %988 = vmatprep.subr.mxu0 0.0
        %989 = vmatpush1.msra.mxu0 0.0
        %990 = vmatprep.subr.mxu0 0.0
        %991 = vmatpush1.msra.mxu0 0.0
        %992 = vmatprep.subr.mxu0 0.0
        %993 = vmatpush1.msra.mxu0 0.0
        %994 = vmatprep.subr.mxu0 0.0
        %995 = vmatpush1.msra.mxu0 0.0
        %996 = vmatprep.subr.mxu0 0.0
        %997 = vmatpush1.msra.mxu0 0.0
        %998 = vmatprep.subr.mxu0 0.0
        %999 = vmatpush1.msra.mxu0 0.0
        %1000 = vmatprep.subr.mxu0 0.0
        %1001 = vmatpush1.msra.mxu0 0.0
        %1002 = vmatprep.subr.mxu0 0.0
        %1003 = vmatpush1.msra.mxu0 0.0
        %1004 = vmatprep.subr.mxu0 0.0
        %1005 = vmatpush1.msra.mxu0 0.0
        %1006 = vmatprep.subr.mxu0 0.0
        %1007 = vmatpush1.msra.mxu0 0.0
        %1008 = vmatprep.subr.mxu0 0.0
        %1009 = vmatpush1.msra.mxu0 0.0
        %1010 = vmatprep.subr.mxu0 0.0
        %1011 = vmatpush1.msra.mxu0 0.0
        %1012 = vmatprep.subr.mxu0 0.0
        %1013 = vmatpush1.msra.mxu0 0.0
        %1014 = vmatprep.subr.mxu0 0.0
        %1015 = vmatpush1.msra.mxu0 0.0
        %1016 = vmatprep.subr.mxu0 0.0
        %1017 = vmatpush1.msra.mxu0 0.0
        %1018 = vmatprep.subr.mxu0 0.0
        %1019 = vmatpush1.msra.mxu0 0.0
        %1020 = vmatprep.mubr.f32.mxu0 0.0
        %1021 = vmatmul.mubr.f32.gmra.mrb[0].mxu0 %v671
        %v1022 = vpop.f32.mrb[0].mxu0
        %v1023 = vadd.f32 %v592, %v1022
        %v1024 = vpop.f32.mrb[0].mxu0
        %1025 = vmatprep.mubr.f32.mxu0 0.0
        %1026 = vmatmul.mubr.f32.gmra.mrb[0].mxu0 %v674
        %v1027 = vpop.f32.mrb[0].mxu0
        %v1028 = vadd.f32 %v597, %v1027
        %v1029 = vpop.f32.mrb[0].mxu0
        %1030 = vmatprep.mubr.f32.mxu0 0.0
        %1031 = vmatmul.mubr.f32.gmra.mrb[0].mxu0 %v677
        %v1032 = vpop.f32.mrb[0].mxu0
        %v1033 = vadd.f32 %v602, %v1032
        %v1034 = vpop.f32.mrb[0].mxu0
        %1035 = vmatprep.mubr.f32.mxu0 0.0
        %1036 = vmatmul.mubr.f32.gmra.mrb[0].mxu0 %v680
        %v1037 = vpop.f32.mrb[0].mxu0
        %v1038 = vadd.f32 %v607, %v1037
        %v1039 = vpop.f32.mrb[0].mxu0
        %1040 = vmatprep.mubr.f32.mxu0 0.0
        %1041 = vmatmul.mubr.f32.gmra.mrb[0].mxu0 %v683
        %v1042 = vpop.f32.mrb[0].mxu0
        %v1043 = vadd.f32 %v612, %v1042
        %v1044 = vpop.f32.mrb[0].mxu0
        %1045 = vmatprep.mubr.f32.mxu0 0.0
        %1046 = vmatmul.mubr.f32.gmra.mrb[0].mxu0 %v686
        %v1047 = vpop.f32.mrb[0].mxu0
        %v1048 = vadd.f32 %v617, %v1047
        %v1049 = vpop.f32.mrb[0].mxu0
        %1050 = vmatprep.mubr.f32.mxu0 0.0
        %1051 = vmatmul.mubr.f32.gmra.mrb[0].mxu0 %v689
        %v1052 = vpop.f32.mrb[0].mxu0
        %v1053 = vadd.f32 %v622, %v1052
        %v1054 = vpop.f32.mrb[0].mxu0
        %1055 = vmatprep.mubr.f32.mxu0 0.0
        %1056 = vmatmul.mubr.f32.gmra.mrb[0].mxu0 %v692
        %v1057 = vpop.f32.mrb[0].mxu0
        %v1058 = vadd.f32 %v627, %v1057
        %v1059 = vpop.f32.mrb[0].mxu0
        %1060 = vmatprep.mubr.f32.mxu0 0.0
        %1061 = vmatmul.mubr.f32.gmra.mrb[0].mxu0 %v695
        %v1062 = vpop.f32.mrb[0].mxu0
        %v1063 = vadd.f32 %v632, %v1062
        %v1064 = vpop.f32.mrb[0].mxu0
        %1065 = vmatprep.mubr.f32.mxu0 0.0
        %1066 = vmatmul.mubr.f32.gmra.mrb[0].mxu0 %v698
        %v1067 = vpop.f32.mrb[0].mxu0
        %v1068 = vadd.f32 %v637, %v1067
        %v1069 = vpop.f32.mrb[0].mxu0
        %1070 = vmatprep.mubr.f32.mxu0 0.0
        %1071 = vmatmul.mubr.f32.gmra.mrb[0].mxu0 %v701
        %v1072 = vpop.f32.mrb[0].mxu0
        %v1073 = vadd.f32 %v642, %v1072
        %v1074 = vpop.f32.mrb[0].mxu0
        %1075 = vmatprep.mubr.f32.mxu0 0.0
        %1076 = vmatmul.mubr.f32.gmra.mrb[0].mxu0 %v704
        %v1077 = vpop.f32.mrb[0].mxu0
        %v1078 = vadd.f32 %v647, %v1077
        %v1079 = vpop.f32.mrb[0].mxu0
        %1080 = vmatprep.mubr.f32.mxu0 0.0
        %1081 = vmatmul.mubr.f32.gmra.mrb[0].mxu0 %v707
        %v1082 = vpop.f32.mrb[0].mxu0
        %v1083 = vadd.f32 %v652, %v1082
        %v1084 = vpop.f32.mrb[0].mxu0
        %1085 = vmatprep.mubr.f32.mxu0 0.0
        %1086 = vmatmul.mubr.f32.gmra.mrb[0].mxu0 %v710
        %v1087 = vpop.f32.mrb[0].mxu0
        %v1088 = vadd.f32 %v657, %v1087
        %v1089 = vpop.f32.mrb[0].mxu0
        %1090 = vmatprep.mubr.f32.mxu0 0.0
        %1091 = vmatmul.mubr.f32.gmra.mrb[0].mxu0 %v713
        %v1092 = vpop.f32.mrb[0].mxu0
        %v1093 = vadd.f32 %v662, %v1092
        %v1094 = vpop.f32.mrb[0].mxu0
        %1095 = vmatprep.mubr.f32.mxu0 0.0
        %1096 = vmatmul.mubr.f32.gmra.mrb[0].mxu0 %v716
        %v1097 = vpop.f32.mrb[0].mxu0
        %v1098 = vadd.f32 %v667, %v1097
        %v1099 = vpop.f32.mrb[0].mxu0
        %1100 = vdwg.mxu0
        %v1101 = vmax.f32 %v1023, 0.0
        %v1102 = vmax.f32 %v1028, 0.0
        %v1103 = vmax.f32 %v1033, 0.0
        %v1104 = vmax.f32 %v1038, 0.0
        %v1105 = vmax.f32 %v1043, 0.0
        %v1106 = vmax.f32 %v1048, 0.0
        %v1107 = vmax.f32 %v1053, 0.0
        %v1108 = vmax.f32 %v1058, 0.0
        %v1109 = vmax.f32 %v1063, 0.0
        %v1110 = vmax.f32 %v1068, 0.0
        %v1111 = vmax.f32 %v1073, 0.0
        %v1112 = vmax.f32 %v1078, 0.0
        %v1113 = vmax.f32 %v1083, 0.0
        %v1114 = vmax.f32 %v1088, 0.0
        %v1115 = vmax.f32 %v1093, 0.0
        %v1116 = vmax.f32 %v1098, 0.0
        %1117 = vmatprep.subr.mxu0 0.0
        %1118 = vmatpush1.msra.mxu0 %v1101
        %1119 = vmatprep.subr.mxu0 0.0
        %1120 = vmatpush1.msra.mxu0 %v1102
        %1121 = vmatprep.subr.mxu0 0.0
        %1122 = vmatpush1.msra.mxu0 %v1103
        %1123 = vmatprep.subr.mxu0 0.0
        %1124 = vmatpush1.msra.mxu0 %v1104
        %1125 = vmatprep.subr.mxu0 0.0
        %1126 = vmatpush1.msra.mxu0 %v1105
        %1127 = vmatprep.subr.mxu0 0.0
        %1128 = vmatpush1.msra.mxu0 %v1106
        %1129 = vmatprep.subr.mxu0 0.0
        %1130 = vmatpush1.msra.mxu0 %v1107
        %1131 = vmatprep.subr.mxu0 0.0
        %1132 = vmatpush1.msra.mxu0 %v1108
        %1133 = vmatprep.subr.mxu0 0.0
        %1134 = vmatpush1.msra.mxu0 %v1109
        %1135 = vmatprep.subr.mxu0 0.0
        %1136 = vmatpush1.msra.mxu0 %v1110
        %1137 = vmatprep.subr.mxu0 0.0
        %1138 = vmatpush1.msra.mxu0 %v1111
        %1139 = vmatprep.subr.mxu0 0.0
        %1140 = vmatpush1.msra.mxu0 %v1112
        %1141 = vmatprep.subr.mxu0 0.0
        %1142 = vmatpush1.msra.mxu0 %v1113
        %1143 = vmatprep.subr.mxu0 0.0
        %1144 = vmatpush1.msra.mxu0 %v1114
        %1145 = vmatprep.subr.mxu0 0.0
        %1146 = vmatpush1.msra.mxu0 %v1115
        %1147 = vmatprep.subr.mxu0 0.0
        %1148 = vmatpush1.msra.mxu0 %v1116
        %1149 = vmatprep.subr.mxu0 0.0
        %1150 = vmatpush1.msra.mxu0 0.0
        %1151 = vmatprep.subr.mxu0 0.0
        %1152 = vmatpush1.msra.mxu0 0.0
        %1153 = vmatprep.subr.mxu0 0.0
        %1154 = vmatpush1.msra.mxu0 0.0
        %1155 = vmatprep.subr.mxu0 0.0
        %1156 = vmatpush1.msra.mxu0 0.0
        %1157 = vmatprep.subr.mxu0 0.0
        %1158 = vmatpush1.msra.mxu0 0.0
        %1159 = vmatprep.subr.mxu0 0.0
        %1160 = vmatpush1.msra.mxu0 0.0
        %1161 = vmatprep.subr.mxu0 0.0
        %1162 = vmatpush1.msra.mxu0 0.0
        %1163 = vmatprep.subr.mxu0 0.0
        %1164 = vmatpush1.msra.mxu0 0.0
        %1165 = vmatprep.subr.mxu0 0.0
        %1166 = vmatpush1.msra.mxu0 0.0
        %1167 = vmatprep.subr.mxu0 0.0
        %1168 = vmatpush1.msra.mxu0 0.0
        %1169 = vmatprep.subr.mxu0 0.0
        %1170 = vmatpush1.msra.mxu0 0.0
        %1171 = vmatprep.subr.mxu0 0.0
        %1172 = vmatpush1.msra.mxu0 0.0
        %1173 = vmatprep.subr.mxu0 0.0
        %1174 = vmatpush1.msra.mxu0 0.0
        %1175 = vmatprep.subr.mxu0 0.0
        %1176 = vmatpush1.msra.mxu0 0.0
        %1177 = vmatprep.subr.mxu0 0.0
        %1178 = vmatpush1.msra.mxu0 0.0
        %1179 = vmatprep.subr.mxu0 0.0
        %1180 = vmatpush1.msra.mxu0 0.0
        %1181 = vmatprep.mubr.f32.mxu0 0.0
        %1182 = vmatmul.mubr.f32.gmra.mrb[0].mxu0 %v403
        %v1183 = vpop.f32.mrb[0].mxu0
        %v1184 = vadd.f32 %v882, %v1183
        %v1185 = vpop.f32.mrb[0].mxu0
        %1186 = vdwg.mxu0
        %v1187 = vadd.f32 %v588, %v1184
        %s1188 = scalar_lea.vmem %s350, 8 [#allocation5]
        %1189 = vst [vmem:[%s1188] sm:$0xff] %v1187
        %s1190 = sand.u32 %s228, 1
        %s1191 = scalar_lea.sflag [#allocation4], %s1190
        %s1192 = sand.u32 %s228, 1
        %s1193 = smul.addr %s1192, 16
        %s1194 = scalar_lea.vmem [#allocation5], %s1193
        // Predicated region
        $region61: #{tpu_custom_call.1} parent=55 // pred_check
          %p1195 = pneg %p238
        $region62: #{tpu_custom_call.1} parent=55 // pred_check_branch
          %1197 = sbr.rel (%p1195) target = $region64
        $region63: #{tpu_custom_call.1} parent=55 // pred_region
          %s1198 = smul.u32 2, %s26
          %s1200 = ssub.s32 256, 256
          %1201 = vsyncadd %s1191, %s1200
          %s1202 = smul.addr %s1198, 128
          %s1203 = scalar_lea.hbm %s9, %s1202
          %s1204 = sshll.u32 %s1194, 4
          %s1205 = int_to_ptr.vmem [resolvable:$true] %s1204
          %1210 = dma.vmem_to_hbm [thread:$0]  %s1205, 256, %s1203, %s1191, 128, 128, 8
        $region64: #{tpu_custom_call.1} parent=55 // pred_fallthru
          _
      $region56: #{tpu_custom_call.1} parent=5 // pred_fallthru
        _
      %p1211 = scmp.le.s32.totalorder 2, %s21
      // Predicated region
      $region65: #{tpu_custom_call.1} parent=5 // pred_check
        %p1212 = pneg %p1211
      $region66: #{tpu_custom_call.1} parent=5 // pred_check_branch
        %1214 = sbr.rel (%p1212) target = $region68
      $region67: #{tpu_custom_call.1} parent=5 // pred_region
        %s1215 = ssub.s32 %s21, 2
        // Predicated region
        $region69: #{tpu_custom_call.1} parent=67 // pred_check
          %p1216 = pneg %p244
        $region70: #{tpu_custom_call.1} parent=67 // pred_check_branch
          %1218 = sbr.rel (%p1216) target = $region72
        $region71: #{tpu_custom_call.1} parent=67 // pred_region
          %s1219 = sand.u32 %s229, 1
          %s1220 = scalar_lea.sflag [#allocation4], %s1219
          %s1221 = sand.u32 %s229, 1
          %s1222 = smul.addr %s1221, 16
          %s1223 = scalar_lea.vmem [#allocation5], %s1222
          %1224 = dma.done %s1220, 256
        $region72: #{tpu_custom_call.1} parent=67 // pred_fallthru
          _
      $region68: #{tpu_custom_call.1} parent=5 // pred_fallthru
        _
    $region6: #{tpu_custom_call.1} parent=1 // loop_footer
      %s25 = sadd.s32 1, %s21
    $region7: #{tpu_custom_call.1} parent=1 // loop_footer_branch
      %20 = sbr.rel target = $region3
    $region8: #{tpu_custom_call.1} parent=1 // loop_exit
      _
    %1225 = vsyncpa [#allocation3], 1
    %s1226 = scalar_lea.sflag [#allocation3], 1
    %1227 = vsyncpa %s1226, 1
    %1228 = vsyncpa [#allocation4], 1
    %s1229 = scalar_lea.sflag [#allocation4], 1
    %1230 = vsyncpa %s1229, 1

</llo_original>
